<compile_context>
chip_gen: v7x
topology: tpu7x:2x2x1
jax: 0.10.0
libtpu: 0.0.40
codegen_flags: <defaults>
</compile_context>

<pallas_src>
import functools

import jax
import jax.numpy as jnp
from jax.experimental import pallas as pl
from jax.experimental.pallas import tpu as pltpu


def lstm_forward_kernel(x_ref,                      # [T*B, F] time-major rows
                        w1_ref, b1_ref,             # [F, E], [1, E]
                        wih_ref, whh_ref, bl_ref,   # [E, 4H], [H, 4H], [1, 4H]
                        w2_ref, b2_ref,             # [H, C], [1, C]
                        out_ref,                    # [B, C]
                        *, B, T):
    H = whh_ref.shape[0]

    # ---- Hoisted non-recurrent compute: one batched MXU pass over all t ----
    # fc1 + tanh, bias folded here (not re-broadcast per step).
    e = jnp.tanh(
        jnp.dot(x_ref[...], w1_ref[...], preferred_element_type=jnp.float32)
        + b1_ref[...])                                         # [T*B, E]
    # Input-side gate pre-activations for every timestep; LSTM bias folded.
    g_in = (jnp.dot(e, wih_ref[...], preferred_element_type=jnp.float32)
            + bl_ref[...])                                     # [T*B, 4H]

    whh = whh_ref[...]
    h = jnp.zeros((B, H), jnp.float32)
    c = jnp.zeros((B, H), jnp.float32)

    # ---- Serial recurrence: fully unrolled, state carried in vregs --------
    for t in range(T):
        gates = (g_in[t * B:(t + 1) * B, :]
                 + jnp.dot(h, whh, preferred_element_type=jnp.float32))
        sig = jax.nn.sigmoid(gates)      # one whole-vreg EUP pass
        tng = jnp.tanh(gates)            # one whole-vreg EUP pass
        # PyTorch gate order: i, f, g, o (static lane slices).
        i_g = sig[:, 0 * H:1 * H]
        f_g = sig[:, 1 * H:2 * H]
        g_g = tng[:, 2 * H:3 * H]
        o_g = sig[:, 3 * H:4 * H]
        c = f_g * c + i_g * g_g
        h = o_g * jnp.tanh(c)

    # fc2 on the final hidden state.
    out_ref[...] = (jnp.dot(h, w2_ref[...], preferred_element_type=jnp.float32)
                    + b2_ref[...])


def model_wrapper_forward(seqs, params):
    """seqs: [B, T, F] float32 (batch_first, as in the PyTorch wrapper)."""
    B, T, F = seqs.shape
    w1, b1, wih, whh, bl, w2, b2 = params
    C = w2.shape[1]

    # Time-major flatten so each recurrence step reads a contiguous row block
    # of the precomputed gate inputs.  Negligible at these shapes; at scale
    # this would be folded into a T-chunked grid instead of a separate pass.
    x2d = jnp.transpose(seqs, (1, 0, 2)).reshape(T * B, F)

    vmem = pl.BlockSpec(memory_space=pltpu.MemorySpace.VMEM)
    kernel = functools.partial(lstm_forward_kernel, B=B, T=T)
    return pl.pallas_call(
        kernel,
        out_shape=jax.ShapeDtypeStruct((B, C), jnp.float32),
        in_specs=[vmem] * 8,
        out_specs=vmem,
    )(x2d, w1, b1, wih, whh, bl, w2, b2)


def reference_forward(seqs, params):
    """Pure-JAX reference matching torch LSTM_Model forward semantics."""
    w1, b1, wih, whh, bl, w2, b2 = params
    B, T, F = seqs.shape
    H = whh.shape[0]
    e = jnp.tanh(seqs.reshape(B * T, F) @ w1 + b1).reshape(B, T, -1)
    h = jnp.zeros((B, H), jnp.float32)
    c = jnp.zeros((B, H), jnp.float32)
    for t in range(T):
        gates = e[:, t, :] @ wih + h @ whh + bl
        i_g = jax.nn.sigmoid(gates[:, 0 * H:1 * H])
        f_g = jax.nn.sigmoid(gates[:, 1 * H:2 * H])
        g_g = jnp.tanh(gates[:, 2 * H:3 * H])
        o_g = jax.nn.sigmoid(gates[:, 3 * H:4 * H])
        c = f_g * c + i_g * g_g
        h = o_g * jnp.tanh(c)
    return h @ w2 + b2


def init_params(key, num_features, emb, hidden, num_classes):
    ks = jax.random.split(key, 7)
    scale = 0.1
    w1 = scale * jax.random.normal(ks[0], (num_features, emb), jnp.float32)
    b1 = scale * jax.random.normal(ks[1], (1, emb), jnp.float32)
    wih = scale * jax.random.normal(ks[2], (emb, 4 * hidden), jnp.float32)
    whh = scale * jax.random.normal(ks[3], (hidden, 4 * hidden), jnp.float32)
    bl = scale * jax.random.normal(ks[4], (1, 4 * hidden), jnp.float32)
    w2 = scale * jax.random.normal(ks[5], (hidden, num_classes), jnp.float32)
    b2 = scale * jax.random.normal(ks[6], (1, num_classes), jnp.float32)
    return (w1, b1, wih, whh, bl, w2, b2)


if __name__ == "__main__":
    # Small shapes consistent with the module's forward:
    # seqs.size(0) = batch, seqs.size(1) = seq_len, last dim = num_features.
    B, T, F = 2, 8, 4          # batch, sequence length, num_features
    EMB, HID, C = 32, 32, 2    # fc1 width, LSTM hidden size, num classes

    key = jax.random.PRNGKey(0)
    k_in, k_par = jax.random.split(key)
    seqs = jax.random.normal(k_in, (B, T, F), jnp.float32)
    params = init_params(k_par, F, EMB, HID, C)

    out = jax.block_until_ready(model_wrapper_forward(seqs, params))
    assert out.shape == (B, C)

    ref = jax.block_until_ready(reference_forward(seqs, params))
    assert jnp.allclose(out, ref, atol=1e-5, rtol=1e-5), (out, ref)

    print("KERNEL_OK")
</pallas_src>

<mosaic_0001>
module attributes {stable_mosaic.version = 11 : i64} {
  func.func @lstm_forward_kernel(%arg0: memref<16x4xf32, #tpu.memory_space<vmem>>, %arg1: memref<4x32xf32, #tpu.memory_space<vmem>>, %arg2: memref<1x32xf32, #tpu.memory_space<vmem>>, %arg3: memref<32x128xf32, #tpu.memory_space<vmem>>, %arg4: memref<32x128xf32, #tpu.memory_space<vmem>>, %arg5: memref<1x128xf32, #tpu.memory_space<vmem>>, %arg6: memref<32x2xf32, #tpu.memory_space<vmem>>, %arg7: memref<1x2xf32, #tpu.memory_space<vmem>>, %arg8: memref<2x2xf32, #tpu.memory_space<vmem>>) attributes {dimension_semantics = [], scalar_prefetch = 0 : i64, scratch_operands = 0 : i64, tpu.core_type = #tpu.core_type<tc>} {
    %c0 = arith.constant 0 : index
    %c0_0 = arith.constant 0 : index
    %0 = vector.load %arg0[%c0, %c0_0] : memref<16x4xf32, #tpu.memory_space<vmem>>, vector<16x4xf32>
    %c0_1 = arith.constant 0 : index
    %c0_2 = arith.constant 0 : index
    %1 = vector.load %arg1[%c0_1, %c0_2] : memref<4x32xf32, #tpu.memory_space<vmem>>, vector<4x32xf32>
    %cst = arith.constant dense<0.000000e+00> : vector<16x32xf32>
    %2 = tpu.matmul %0, %1, %cst {dimension_numbers = #tpu.dot_dimension_numbers<[1], [0], [0], [1], [0, 0, 1, 1], [], []>} : vector<16x4xf32>, vector<4x32xf32>, vector<16x32xf32> -> vector<16x32xf32>
    %c0_3 = arith.constant 0 : index
    %c0_4 = arith.constant 0 : index
    %3 = vector.load %arg2[%c0_3, %c0_4] : memref<1x32xf32, #tpu.memory_space<vmem>>, vector<1x32xf32>
    %4 = vector.broadcast %3 : vector<1x32xf32> to vector<16x32xf32>
    %5 = arith.addf %2, %4 : vector<16x32xf32>
    %6 = math.tanh %5 : vector<16x32xf32>
    %c0_5 = arith.constant 0 : index
    %c0_6 = arith.constant 0 : index
    %7 = vector.load %arg3[%c0_5, %c0_6] : memref<32x128xf32, #tpu.memory_space<vmem>>, vector<32x128xf32>
    %cst_7 = arith.constant dense<0.000000e+00> : vector<16x128xf32>
    %8 = tpu.matmul %6, %7, %cst_7 {dimension_numbers = #tpu.dot_dimension_numbers<[1], [0], [0], [1], [0, 0, 1, 1], [], []>} : vector<16x32xf32>, vector<32x128xf32>, vector<16x128xf32> -> vector<16x128xf32>
    %c0_8 = arith.constant 0 : index
    %c0_9 = arith.constant 0 : index
    %9 = vector.load %arg5[%c0_8, %c0_9] : memref<1x128xf32, #tpu.memory_space<vmem>>, vector<1x128xf32>
    %10 = vector.broadcast %9 : vector<1x128xf32> to vector<16x128xf32>
    %11 = arith.addf %8, %10 : vector<16x128xf32>
    %c0_10 = arith.constant 0 : index
    %c0_11 = arith.constant 0 : index
    %12 = vector.load %arg4[%c0_10, %c0_11] : memref<32x128xf32, #tpu.memory_space<vmem>>, vector<32x128xf32>
    %cst_12 = arith.constant 0.000000e+00 : f32
    %13 = vector.broadcast %cst_12 : f32 to vector<2x32xf32>
    %cst_13 = arith.constant 0.000000e+00 : f32
    %14 = vector.broadcast %cst_13 : f32 to vector<2x32xf32>
    %15 = vector.extract_strided_slice %11 {offsets = [0, 0], sizes = [2, 128], strides = [1, 1]} : vector<16x128xf32> to vector<2x128xf32>
    %cst_14 = arith.constant dense<0.000000e+00> : vector<2x128xf32>
    %16 = tpu.matmul %13, %12, %cst_14 {dimension_numbers = #tpu.dot_dimension_numbers<[1], [0], [0], [1], [0, 0, 1, 1], [], []>} : vector<2x32xf32>, vector<32x128xf32>, vector<2x128xf32> -> vector<2x128xf32>
    %17 = arith.addf %15, %16 : vector<2x128xf32>
    %18 = arith.negf %17 : vector<2x128xf32>
    %19 = math.exp %18 : vector<2x128xf32>
    %cst_15 = arith.constant 1.000000e+00 : f32
    %20 = vector.broadcast %cst_15 : f32 to vector<2x128xf32>
    %21 = arith.addf %20, %19 : vector<2x128xf32>
    %22 = arith.divf %20, %21 : vector<2x128xf32>
    %23 = math.tanh %17 : vector<2x128xf32>
    %24 = vector.extract_strided_slice %22 {offsets = [0, 0], sizes = [2, 32], strides = [1, 1]} : vector<2x128xf32> to vector<2x32xf32>
    %25 = vector.extract_strided_slice %22 {offsets = [0, 32], sizes = [2, 32], strides = [1, 1]} : vector<2x128xf32> to vector<2x32xf32>
    %26 = vector.extract_strided_slice %23 {offsets = [0, 64], sizes = [2, 32], strides = [1, 1]} : vector<2x128xf32> to vector<2x32xf32>
    %27 = vector.extract_strided_slice %22 {offsets = [0, 96], sizes = [2, 32], strides = [1, 1]} : vector<2x128xf32> to vector<2x32xf32>
    %28 = arith.mulf %25, %14 : vector<2x32xf32>
    %29 = arith.mulf %24, %26 : vector<2x32xf32>
    %30 = arith.addf %28, %29 : vector<2x32xf32>
    %31 = math.tanh %30 : vector<2x32xf32>
    %32 = arith.mulf %27, %31 : vector<2x32xf32>
    %33 = vector.extract_strided_slice %11 {offsets = [2, 0], sizes = [2, 128], strides = [1, 1]} : vector<16x128xf32> to vector<2x128xf32>
    %cst_16 = arith.constant dense<0.000000e+00> : vector<2x128xf32>
    %34 = tpu.matmul %32, %12, %cst_16 {dimension_numbers = #tpu.dot_dimension_numbers<[1], [0], [0], [1], [0, 0, 1, 1], [], []>} : vector<2x32xf32>, vector<32x128xf32>, vector<2x128xf32> -> vector<2x128xf32>
    %35 = arith.addf %33, %34 : vector<2x128xf32>
    %36 = arith.negf %35 : vector<2x128xf32>
    %37 = math.exp %36 : vector<2x128xf32>
    %cst_17 = arith.constant 1.000000e+00 : f32
    %38 = vector.broadcast %cst_17 : f32 to vector<2x128xf32>
    %39 = arith.addf %38, %37 : vector<2x128xf32>
    %40 = arith.divf %38, %39 : vector<2x128xf32>
    %41 = math.tanh %35 : vector<2x128xf32>
    %42 = vector.extract_strided_slice %40 {offsets = [0, 0], sizes = [2, 32], strides = [1, 1]} : vector<2x128xf32> to vector<2x32xf32>
    %43 = vector.extract_strided_slice %40 {offsets = [0, 32], sizes = [2, 32], strides = [1, 1]} : vector<2x128xf32> to vector<2x32xf32>
    %44 = vector.extract_strided_slice %41 {offsets = [0, 64], sizes = [2, 32], strides = [1, 1]} : vector<2x128xf32> to vector<2x32xf32>
    %45 = vector.extract_strided_slice %40 {offsets = [0, 96], sizes = [2, 32], strides = [1, 1]} : vector<2x128xf32> to vector<2x32xf32>
    %46 = arith.mulf %43, %30 : vector<2x32xf32>
    %47 = arith.mulf %42, %44 : vector<2x32xf32>
    %48 = arith.addf %46, %47 : vector<2x32xf32>
    %49 = math.tanh %48 : vector<2x32xf32>
    %50 = arith.mulf %45, %49 : vector<2x32xf32>
    %51 = vector.extract_strided_slice %11 {offsets = [4, 0], sizes = [2, 128], strides = [1, 1]} : vector<16x128xf32> to vector<2x128xf32>
    %cst_18 = arith.constant dense<0.000000e+00> : vector<2x128xf32>
    %52 = tpu.matmul %50, %12, %cst_18 {dimension_numbers = #tpu.dot_dimension_numbers<[1], [0], [0], [1], [0, 0, 1, 1], [], []>} : vector<2x32xf32>, vector<32x128xf32>, vector<2x128xf32> -> vector<2x128xf32>
    %53 = arith.addf %51, %52 : vector<2x128xf32>
    %54 = arith.negf %53 : vector<2x128xf32>
    %55 = math.exp %54 : vector<2x128xf32>
    %cst_19 = arith.constant 1.000000e+00 : f32
    %56 = vector.broadcast %cst_19 : f32 to vector<2x128xf32>
    %57 = arith.addf %56, %55 : vector<2x128xf32>
    %58 = arith.divf %56, %57 : vector<2x128xf32>
    %59 = math.tanh %53 : vector<2x128xf32>
    %60 = vector.extract_strided_slice %58 {offsets = [0, 0], sizes = [2, 32], strides = [1, 1]} : vector<2x128xf32> to vector<2x32xf32>
    %61 = vector.extract_strided_slice %58 {offsets = [0, 32], sizes = [2, 32], strides = [1, 1]} : vector<2x128xf32> to vector<2x32xf32>
    %62 = vector.extract_strided_slice %59 {offsets = [0, 64], sizes = [2, 32], strides = [1, 1]} : vector<2x128xf32> to vector<2x32xf32>
    %63 = vector.extract_strided_slice %58 {offsets = [0, 96], sizes = [2, 32], strides = [1, 1]} : vector<2x128xf32> to vector<2x32xf32>
    %64 = arith.mulf %61, %48 : vector<2x32xf32>
    %65 = arith.mulf %60, %62 : vector<2x32xf32>
    %66 = arith.addf %64, %65 : vector<2x32xf32>
    %67 = math.tanh %66 : vector<2x32xf32>
    %68 = arith.mulf %63, %67 : vector<2x32xf32>
    %69 = vector.extract_strided_slice %11 {offsets = [6, 0], sizes = [2, 128], strides = [1, 1]} : vector<16x128xf32> to vector<2x128xf32>
    %cst_20 = arith.constant dense<0.000000e+00> : vector<2x128xf32>
    %70 = tpu.matmul %68, %12, %cst_20 {dimension_numbers = #tpu.dot_dimension_numbers<[1], [0], [0], [1], [0, 0, 1, 1], [], []>} : vector<2x32xf32>, vector<32x128xf32>, vector<2x128xf32> -> vector<2x128xf32>
    %71 = arith.addf %69, %70 : vector<2x128xf32>
    %72 = arith.negf %71 : vector<2x128xf32>
    %73 = math.exp %72 : vector<2x128xf32>
    %cst_21 = arith.constant 1.000000e+00 : f32
    %74 = vector.broadcast %cst_21 : f32 to vector<2x128xf32>
    %75 = arith.addf %74, %73 : vector<2x128xf32>
    %76 = arith.divf %74, %75 : vector<2x128xf32>
    %77 = math.tanh %71 : vector<2x128xf32>
    %78 = vector.extract_strided_slice %76 {offsets = [0, 0], sizes = [2, 32], strides = [1, 1]} : vector<2x128xf32> to vector<2x32xf32>
    %79 = vector.extract_strided_slice %76 {offsets = [0, 32], sizes = [2, 32], strides = [1, 1]} : vector<2x128xf32> to vector<2x32xf32>
    %80 = vector.extract_strided_slice %77 {offsets = [0, 64], sizes = [2, 32], strides = [1, 1]} : vector<2x128xf32> to vector<2x32xf32>
    %81 = vector.extract_strided_slice %76 {offsets = [0, 96], sizes = [2, 32], strides = [1, 1]} : vector<2x128xf32> to vector<2x32xf32>
    %82 = arith.mulf %79, %66 : vector<2x32xf32>
    %83 = arith.mulf %78, %80 : vector<2x32xf32>
    %84 = arith.addf %82, %83 : vector<2x32xf32>
    %85 = math.tanh %84 : vector<2x32xf32>
    %86 = arith.mulf %81, %85 : vector<2x32xf32>
    %87 = vector.extract_strided_slice %11 {offsets = [8, 0], sizes = [2, 128], strides = [1, 1]} : vector<16x128xf32> to vector<2x128xf32>
    %cst_22 = arith.constant dense<0.000000e+00> : vector<2x128xf32>
    %88 = tpu.matmul %86, %12, %cst_22 {dimension_numbers = #tpu.dot_dimension_numbers<[1], [0], [0], [1], [0, 0, 1, 1], [], []>} : vector<2x32xf32>, vector<32x128xf32>, vector<2x128xf32> -> vector<2x128xf32>
    %89 = arith.addf %87, %88 : vector<2x128xf32>
    %90 = arith.negf %89 : vector<2x128xf32>
    %91 = math.exp %90 : vector<2x128xf32>
    %cst_23 = arith.constant 1.000000e+00 : f32
    %92 = vector.broadcast %cst_23 : f32 to vector<2x128xf32>
    %93 = arith.addf %92, %91 : vector<2x128xf32>
    %94 = arith.divf %92, %93 : vector<2x128xf32>
    %95 = math.tanh %89 : vector<2x128xf32>
    %96 = vector.extract_strided_slice %94 {offsets = [0, 0], sizes = [2, 32], strides = [1, 1]} : vector<2x128xf32> to vector<2x32xf32>
    %97 = vector.extract_strided_slice %94 {offsets = [0, 32], sizes = [2, 32], strides = [1, 1]} : vector<2x128xf32> to vector<2x32xf32>
    %98 = vector.extract_strided_slice %95 {offsets = [0, 64], sizes = [2, 32], strides = [1, 1]} : vector<2x128xf32> to vector<2x32xf32>
    %99 = vector.extract_strided_slice %94 {offsets = [0, 96], sizes = [2, 32], strides = [1, 1]} : vector<2x128xf32> to vector<2x32xf32>
    %100 = arith.mulf %97, %84 : vector<2x32xf32>
    %101 = arith.mulf %96, %98 : vector<2x32xf32>
    %102 = arith.addf %100, %101 : vector<2x32xf32>
    %103 = math.tanh %102 : vector<2x32xf32>
    %104 = arith.mulf %99, %103 : vector<2x32xf32>
    %105 = vector.extract_strided_slice %11 {offsets = [10, 0], sizes = [2, 128], strides = [1, 1]} : vector<16x128xf32> to vector<2x128xf32>
    %cst_24 = arith.constant dense<0.000000e+00> : vector<2x128xf32>
    %106 = tpu.matmul %104, %12, %cst_24 {dimension_numbers = #tpu.dot_dimension_numbers<[1], [0], [0], [1], [0, 0, 1, 1], [], []>} : vector<2x32xf32>, vector<32x128xf32>, vector<2x128xf32> -> vector<2x128xf32>
    %107 = arith.addf %105, %106 : vector<2x128xf32>
    %108 = arith.negf %107 : vector<2x128xf32>
    %109 = math.exp %108 : vector<2x128xf32>
    %cst_25 = arith.constant 1.000000e+00 : f32
    %110 = vector.broadcast %cst_25 : f32 to vector<2x128xf32>
    %111 = arith.addf %110, %109 : vector<2x128xf32>
    %112 = arith.divf %110, %111 : vector<2x128xf32>
    %113 = math.tanh %107 : vector<2x128xf32>
    %114 = vector.extract_strided_slice %112 {offsets = [0, 0], sizes = [2, 32], strides = [1, 1]} : vector<2x128xf32> to vector<2x32xf32>
    %115 = vector.extract_strided_slice %112 {offsets = [0, 32], sizes = [2, 32], strides = [1, 1]} : vector<2x128xf32> to vector<2x32xf32>
    %116 = vector.extract_strided_slice %113 {offsets = [0, 64], sizes = [2, 32], strides = [1, 1]} : vector<2x128xf32> to vector<2x32xf32>
    %117 = vector.extract_strided_slice %112 {offsets = [0, 96], sizes = [2, 32], strides = [1, 1]} : vector<2x128xf32> to vector<2x32xf32>
    %118 = arith.mulf %115, %102 : vector<2x32xf32>
    %119 = arith.mulf %114, %116 : vector<2x32xf32>
    %120 = arith.addf %118, %119 : vector<2x32xf32>
    %121 = math.tanh %120 : vector<2x32xf32>
    %122 = arith.mulf %117, %121 : vector<2x32xf32>
    %123 = vector.extract_strided_slice %11 {offsets = [12, 0], sizes = [2, 128], strides = [1, 1]} : vector<16x128xf32> to vector<2x128xf32>
    %cst_26 = arith.constant dense<0.000000e+00> : vector<2x128xf32>
    %124 = tpu.matmul %122, %12, %cst_26 {dimension_numbers = #tpu.dot_dimension_numbers<[1], [0], [0], [1], [0, 0, 1, 1], [], []>} : vector<2x32xf32>, vector<32x128xf32>, vector<2x128xf32> -> vector<2x128xf32>
    %125 = arith.addf %123, %124 : vector<2x128xf32>
    %126 = arith.negf %125 : vector<2x128xf32>
    %127 = math.exp %126 : vector<2x128xf32>
    %cst_27 = arith.constant 1.000000e+00 : f32
    %128 = vector.broadcast %cst_27 : f32 to vector<2x128xf32>
    %129 = arith.addf %128, %127 : vector<2x128xf32>
    %130 = arith.divf %128, %129 : vector<2x128xf32>
    %131 = math.tanh %125 : vector<2x128xf32>
    %132 = vector.extract_strided_slice %130 {offsets = [0, 0], sizes = [2, 32], strides = [1, 1]} : vector<2x128xf32> to vector<2x32xf32>
    %133 = vector.extract_strided_slice %130 {offsets = [0, 32], sizes = [2, 32], strides = [1, 1]} : vector<2x128xf32> to vector<2x32xf32>
    %134 = vector.extract_strided_slice %131 {offsets = [0, 64], sizes = [2, 32], strides = [1, 1]} : vector<2x128xf32> to vector<2x32xf32>
    %135 = vector.extract_strided_slice %130 {offsets = [0, 96], sizes = [2, 32], strides = [1, 1]} : vector<2x128xf32> to vector<2x32xf32>
    %136 = arith.mulf %133, %120 : vector<2x32xf32>
    %137 = arith.mulf %132, %134 : vector<2x32xf32>
    %138 = arith.addf %136, %137 : vector<2x32xf32>
    %139 = math.tanh %138 : vector<2x32xf32>
    %140 = arith.mulf %135, %139 : vector<2x32xf32>
    %141 = vector.extract_strided_slice %11 {offsets = [14, 0], sizes = [2, 128], strides = [1, 1]} : vector<16x128xf32> to vector<2x128xf32>
    %cst_28 = arith.constant dense<0.000000e+00> : vector<2x128xf32>
    %142 = tpu.matmul %140, %12, %cst_28 {dimension_numbers = #tpu.dot_dimension_numbers<[1], [0], [0], [1], [0, 0, 1, 1], [], []>} : vector<2x32xf32>, vector<32x128xf32>, vector<2x128xf32> -> vector<2x128xf32>
    %143 = arith.addf %141, %142 : vector<2x128xf32>
    %144 = arith.negf %143 : vector<2x128xf32>
    %145 = math.exp %144 : vector<2x128xf32>
    %cst_29 = arith.constant 1.000000e+00 : f32
    %146 = vector.broadcast %cst_29 : f32 to vector<2x128xf32>
    %147 = arith.addf %146, %145 : vector<2x128xf32>
    %148 = arith.divf %146, %147 : vector<2x128xf32>
    %149 = math.tanh %143 : vector<2x128xf32>
    %150 = vector.extract_strided_slice %148 {offsets = [0, 0], sizes = [2, 32], strides = [1, 1]} : vector<2x128xf32> to vector<2x32xf32>
    %151 = vector.extract_strided_slice %148 {offsets = [0, 32], sizes = [2, 32], strides = [1, 1]} : vector<2x128xf32> to vector<2x32xf32>
    %152 = vector.extract_strided_slice %149 {offsets = [0, 64], sizes = [2, 32], strides = [1, 1]} : vector<2x128xf32> to vector<2x32xf32>
    %153 = vector.extract_strided_slice %148 {offsets = [0, 96], sizes = [2, 32], strides = [1, 1]} : vector<2x128xf32> to vector<2x32xf32>
    %154 = arith.mulf %151, %138 : vector<2x32xf32>
    %155 = arith.mulf %150, %152 : vector<2x32xf32>
    %156 = arith.addf %154, %155 : vector<2x32xf32>
    %157 = math.tanh %156 : vector<2x32xf32>
    %158 = arith.mulf %153, %157 : vector<2x32xf32>
    %c0_30 = arith.constant 0 : index
    %c0_31 = arith.constant 0 : index
    %159 = vector.load %arg6[%c0_30, %c0_31] : memref<32x2xf32, #tpu.memory_space<vmem>>, vector<32x2xf32>
    %cst_32 = arith.constant dense<0.000000e+00> : vector<2x2xf32>
    %160 = tpu.matmul %158, %159, %cst_32 {dimension_numbers = #tpu.dot_dimension_numbers<[1], [0], [0], [1], [0, 0, 1, 1], [], []>} : vector<2x32xf32>, vector<32x2xf32>, vector<2x2xf32> -> vector<2x2xf32>
    %c0_33 = arith.constant 0 : index
    %c0_34 = arith.constant 0 : index
    %161 = vector.load %arg7[%c0_33, %c0_34] : memref<1x2xf32, #tpu.memory_space<vmem>>, vector<1x2xf32>
    %162 = vector.broadcast %161 : vector<1x2xf32> to vector<2x2xf32>
    %163 = arith.addf %160, %162 : vector<2x2xf32>
    %c0_35 = arith.constant 0 : index
    %c0_36 = arith.constant 0 : index
    %164 = vector.load %arg8[%c0_35, %c0_36] : memref<2x2xf32, #tpu.memory_space<vmem>>, vector<2x2xf32>
    tpu.vector_store %arg8[%c0_35, %c0_36], %163 {strides = array<i32>} : memref<2x2xf32, #tpu.memory_space<vmem>>, vector<2x2xf32>,
    return
  }
}

</mosaic_0001>

<llo_original>
// kernel: tpu_custom_call.1
$region0: #{tpu_custom_call.1}
  #allocation0 [shape = 'u32[]', space=smem, size = 0x4, offset = 0x4, fixed_abs, tag = 'smem constant byte address 0x4 - core index']
  #allocation1 [shape = 'u32[144,128]{1,0:T(1,128)}', space=vmem, size = 0x12000, scoped, tag = 'internal scratch']
  %s0 = inlined_call_operand.vmem [shape: f32[16,4], index: 0, kind: input, shape index: {}]
  %s1 = inlined_call_operand.hbm [shape: f32[4,32], index: 1, kind: input, shape index: {}]
  %s2 = inlined_call_operand.vmem [shape: f32[1,32], index: 2, kind: input, shape index: {}]
  %s3 = inlined_call_operand.vmem [shape: f32[32,128], index: 3, kind: input, shape index: {}]
  %s4 = inlined_call_operand.vmem [shape: f32[32,128], index: 4, kind: input, shape index: {}]
  %s5 = inlined_call_operand.vmem [shape: f32[1,128], index: 5, kind: input, shape index: {}]
  %s6 = inlined_call_operand.vmem [shape: f32[32,2], index: 6, kind: input, shape index: {}]
  %s7 = inlined_call_operand.vmem [shape: f32[1,2], index: 7, kind: input, shape index: {}]
  %s8 = inlined_call_operand.hbm [shape: f32[2,2], index: 8, kind: output, shape index: {}]
  %s9 = sld [smem:[#allocation0]]
  $region46: #{tpu_custom_call.1} parent=0
    _
  %s11 = ssub.s32 1, %s9
  %s12 = scalar_select 0, %s11, %s9
  $region1: #{tpu_custom_call.1} parent=0
    #allocation2 [shape = 'u8[2048]{0}', space=vmem, size = 0x800, scoped, tag = 'input window, operand 1, single buffered']
    #allocation3 [shape = 's32[1]{0}', space=sflag, size = 0x4, scoped, tag = 'scoped memory for tpu_custom_call.1']
    #allocation4 [shape = 's32[1]{0}', space=sflag, size = 0x4, scoped, tag = 'scoped memory for tpu_custom_call.1']
    #allocation5 [shape = 'u8[1024]{0}', space=vmem, size = 0x400, scoped, tag = 'output window, operand 0, single buffered']
    %13 = vsyncpa [#allocation3], 0
    %14 = vsyncpa [#allocation4], 0
    // Predicated region
    $region2: #{tpu_custom_call.1} parent=1 // pred_check
      _
    $region3: #{tpu_custom_call.1} parent=1 // pred_check_branch
      %16 = sbr.rel (0) target = $region5
    $region4: #{tpu_custom_call.1} parent=1 // pred_region
      _
    $region5: #{tpu_custom_call.1} parent=1 // pred_fallthru
      _
    // Predicated region
    $region6: #{tpu_custom_call.1} parent=1 // pred_check
      _
    $region7: #{tpu_custom_call.1} parent=1 // pred_check_branch
      %18 = sbr.rel (0) target = $region9
    $region8: #{tpu_custom_call.1} parent=1 // pred_region
      %s20 = ssub.s32 64, 64
      %21 = vsyncadd [#allocation3], %s20
      %s23 = sshll.u32 [#allocation2], 4
      %s24 = int_to_ptr.vmem [resolvable:$true] %s23
      %26 = dma.hbm_to_vmem [thread:$0]  %s1, 64, %s24, [#allocation3]
    $region9: #{tpu_custom_call.1} parent=1 // pred_fallthru
      _
    // Predicated region
    $region10: #{tpu_custom_call.1} parent=1 // pred_check
      _
    $region11: #{tpu_custom_call.1} parent=1 // pred_check_branch
      %28 = sbr.rel (0) target = $region13
    $region12: #{tpu_custom_call.1} parent=1 // pred_region
      _
    $region13: #{tpu_custom_call.1} parent=1 // pred_fallthru
      _
    // Predicated region
    $region14: #{tpu_custom_call.1} parent=1 // pred_check
      _
    $region15: #{tpu_custom_call.1} parent=1 // pred_check_branch
      %30 = sbr.rel (0) target = $region17
    $region16: #{tpu_custom_call.1} parent=1 // pred_region
      _
    $region17: #{tpu_custom_call.1} parent=1 // pred_fallthru
      _
    // Predicated region
    $region18: #{tpu_custom_call.1} parent=1 // pred_check
      _
    $region19: #{tpu_custom_call.1} parent=1 // pred_check_branch
      %32 = sbr.rel (0) target = $region21
    $region20: #{tpu_custom_call.1} parent=1 // pred_region
      _
    $region21: #{tpu_custom_call.1} parent=1 // pred_fallthru
      _
    // Predicated region
    $region22: #{tpu_custom_call.1} parent=1 // pred_check
      _
    $region23: #{tpu_custom_call.1} parent=1 // pred_check_branch
      %34 = sbr.rel (0) target = $region25
    $region24: #{tpu_custom_call.1} parent=1 // pred_region
      _
    $region25: #{tpu_custom_call.1} parent=1 // pred_fallthru
      _
    // Predicated region
    $region26: #{tpu_custom_call.1} parent=1 // pred_check
      _
    $region27: #{tpu_custom_call.1} parent=1 // pred_check_branch
      %36 = sbr.rel (0) target = $region29
    $region28: #{tpu_custom_call.1} parent=1 // pred_region
      _
    $region29: #{tpu_custom_call.1} parent=1 // pred_fallthru
      _
    // Predicated region
    $region30: #{tpu_custom_call.1} parent=1 // pred_check
      _
    $region31: #{tpu_custom_call.1} parent=1 // pred_check_branch
      %38 = sbr.rel (0) target = $region33
    $region32: #{tpu_custom_call.1} parent=1 // pred_region
      _
    $region33: #{tpu_custom_call.1} parent=1 // pred_fallthru
      _
    // Predicated region
    $region34: #{tpu_custom_call.1} parent=1 // pred_check
      _
    $region35: #{tpu_custom_call.1} parent=1 // pred_check_branch
      %40 = sbr.rel (0) target = $region37
    $region36: #{tpu_custom_call.1} parent=1 // pred_region
      %41 = dma.done [#allocation3], 64
    $region37: #{tpu_custom_call.1} parent=1 // pred_fallthru
      _
    %v42 = vld [vmem:[%s0] sm:$0xff]
    %v43 = vld [vmem:[%s0 + $0x8] sm:$0xff]
    %v44 = vld [vmem:[#allocation2] sm:$0xf]
    %v45 = vld [vmem:[%s2] sm:$0x1]
    %v47 = vlaneseq
    %v48 = vshrl.u32 %v47, 7
    %v49 = vsub.s32 0, %v48
    %v50 = vrot.slane %v45, %v49
    %vm52 = vcmask 31744
    %v54 = vsel %vm52, %v42, 0
    %v57 = vsel %vm52, %v43, 0
    %vm59 = vcmask 1043456
    %v61 = vsel %vm59, %v44, 0
    %63 = vmatprep.subr.mxu0 0.0
    %64 = vmatpush1.msra.mxu0 %v61
    %65 = vmatprep.subr.mxu0 0.0
    %66 = vmatpush1.msra.mxu0 0.0
    %67 = vmatprep.subr.mxu0 0.0
    %68 = vmatpush1.msra.mxu0 0.0
    %69 = vmatprep.subr.mxu0 0.0
    %70 = vmatpush1.msra.mxu0 0.0
    %71 = vmatprep.subr.mxu0 0.0
    %72 = vmatpush1.msra.mxu0 0.0
    %73 = vmatprep.subr.mxu0 0.0
    %74 = vmatpush1.msra.mxu0 0.0
    %75 = vmatprep.subr.mxu0 0.0
    %76 = vmatpush1.msra.mxu0 0.0
    %77 = vmatprep.subr.mxu0 0.0
    %78 = vmatpush1.msra.mxu0 0.0
    %79 = vmatprep.subr.mxu0 0.0
    %80 = vmatpush1.msra.mxu0 0.0
    %81 = vmatprep.subr.mxu0 0.0
    %82 = vmatpush1.msra.mxu0 0.0
    %83 = vmatprep.subr.mxu0 0.0
    %84 = vmatpush1.msra.mxu0 0.0
    %85 = vmatprep.subr.mxu0 0.0
    %86 = vmatpush1.msra.mxu0 0.0
    %87 = vmatprep.subr.mxu0 0.0
    %88 = vmatpush1.msra.mxu0 0.0
    %89 = vmatprep.subr.mxu0 0.0
    %90 = vmatpush1.msra.mxu0 0.0
    %91 = vmatprep.subr.mxu0 0.0
    %92 = vmatpush1.msra.mxu0 0.0
    %93 = vmatprep.subr.mxu0 0.0
    %94 = vmatpush1.msra.mxu0 0.0
    %95 = vmatprep.subr.mxu0 0.0
    %96 = vmatpush1.msra.mxu0 0.0
    %97 = vmatprep.subr.mxu0 0.0
    %98 = vmatpush1.msra.mxu0 0.0
    %99 = vmatprep.subr.mxu0 0.0
    %100 = vmatpush1.msra.mxu0 0.0
    %101 = vmatprep.subr.mxu0 0.0
    %102 = vmatpush1.msra.mxu0 0.0
    %103 = vmatprep.subr.mxu0 0.0
    %104 = vmatpush1.msra.mxu0 0.0
    %105 = vmatprep.subr.mxu0 0.0
    %106 = vmatpush1.msra.mxu0 0.0
    %107 = vmatprep.subr.mxu0 0.0
    %108 = vmatpush1.msra.mxu0 0.0
    %109 = vmatprep.subr.mxu0 0.0
    %110 = vmatpush1.msra.mxu0 0.0
    %111 = vmatprep.subr.mxu0 0.0
    %112 = vmatpush1.msra.mxu0 0.0
    %113 = vmatprep.subr.mxu0 0.0
    %114 = vmatpush1.msra.mxu0 0.0
    %115 = vmatprep.subr.mxu0 0.0
    %116 = vmatpush1.msra.mxu0 0.0
    %117 = vmatprep.subr.mxu0 0.0
    %118 = vmatpush1.msra.mxu0 0.0
    %119 = vmatprep.subr.mxu0 0.0
    %120 = vmatpush1.msra.mxu0 0.0
    %121 = vmatprep.subr.mxu0 0.0
    %122 = vmatpush1.msra.mxu0 0.0
    %123 = vmatprep.subr.mxu0 0.0
    %124 = vmatpush1.msra.mxu0 0.0
    %125 = vmatprep.subr.mxu0 0.0
    %126 = vmatpush1.msra.mxu0 0.0
    %127 = vmatprep.mubr.f32.mxu0 0.0
    %128 = vmatmul.mubr.f32.gmra.mrb[0].mxu0 %v54
    %v129 = vpop.f32.mrb[0].mxu0
    %v130 = vadd.f32 %v50, %v129
    %v131 = vpop.f32.mrb[0].mxu0
    %132 = vmatprep.mubr.f32.mxu0 0.0
    %133 = vmatmul.mubr.f32.gmra.mrb[0].mxu0 %v57
    %v134 = vpop.f32.mrb[0].mxu0
    %v135 = vadd.f32 %v50, %v134
    %v136 = vpop.f32.mrb[0].mxu0
    %137 = vdwg.mxu0
    %v138 = vtanh.pop %v130
    %v139 = vtanh.pop %v135
    %v140 = vld [vmem:[%s3] sm:$0xff]
    %v141 = vld [vmem:[%s3 + $0x8] sm:$0xff]
    %v142 = vld [vmem:[%s3 + $0x10] sm:$0xff]
    %v143 = vld [vmem:[%s3 + $0x18] sm:$0xff]
    %v144 = vld [vmem:[%s5] sm:$0x1]
    %v146 = vlaneseq
    %v147 = vshrl.u32 %v146, 7
    %v148 = vsub.s32 0, %v147
    %v149 = vrot.slane %v144, %v148
    %vm151 = vcmask 261120
    %v153 = vsel %vm151, %v138, 0
    %v156 = vsel %vm151, %v139, 0
    %158 = vmatprep.subr.mxu0 0.0
    %159 = vmatpush1.msra.mxu0 %v140
    %160 = vmatprep.subr.mxu0 0.0
    %161 = vmatpush1.msra.mxu0 %v141
    %162 = vmatprep.subr.mxu0 0.0
    %163 = vmatpush1.msra.mxu0 %v142
    %164 = vmatprep.subr.mxu0 0.0
    %165 = vmatpush1.msra.mxu0 %v143
    %166 = vmatprep.subr.mxu0 0.0
    %167 = vmatpush1.msra.mxu0 0.0
    %168 = vmatprep.subr.mxu0 0.0
    %169 = vmatpush1.msra.mxu0 0.0
    %170 = vmatprep.subr.mxu0 0.0
    %171 = vmatpush1.msra.mxu0 0.0
    %172 = vmatprep.subr.mxu0 0.0
    %173 = vmatpush1.msra.mxu0 0.0
    %174 = vmatprep.subr.mxu0 0.0
    %175 = vmatpush1.msra.mxu0 0.0
    %176 = vmatprep.subr.mxu0 0.0
    %177 = vmatpush1.msra.mxu0 0.0
    %178 = vmatprep.subr.mxu0 0.0
    %179 = vmatpush1.msra.mxu0 0.0
    %180 = vmatprep.subr.mxu0 0.0
    %181 = vmatpush1.msra.mxu0 0.0
    %182 = vmatprep.subr.mxu0 0.0
    %183 = vmatpush1.msra.mxu0 0.0
    %184 = vmatprep.subr.mxu0 0.0
    %185 = vmatpush1.msra.mxu0 0.0
    %186 = vmatprep.subr.mxu0 0.0
    %187 = vmatpush1.msra.mxu0 0.0
    %188 = vmatprep.subr.mxu0 0.0
    %189 = vmatpush1.msra.mxu0 0.0
    %190 = vmatprep.subr.mxu0 0.0
    %191 = vmatpush1.msra.mxu0 0.0
    %192 = vmatprep.subr.mxu0 0.0
    %193 = vmatpush1.msra.mxu0 0.0
    %194 = vmatprep.subr.mxu0 0.0
    %195 = vmatpush1.msra.mxu0 0.0
    %196 = vmatprep.subr.mxu0 0.0
    %197 = vmatpush1.msra.mxu0 0.0
    %198 = vmatprep.subr.mxu0 0.0
    %199 = vmatpush1.msra.mxu0 0.0
    %200 = vmatprep.subr.mxu0 0.0
    %201 = vmatpush1.msra.mxu0 0.0
    %202 = vmatprep.subr.mxu0 0.0
    %203 = vmatpush1.msra.mxu0 0.0
    %204 = vmatprep.subr.mxu0 0.0
    %205 = vmatpush1.msra.mxu0 0.0
    %206 = vmatprep.subr.mxu0 0.0
    %207 = vmatpush1.msra.mxu0 0.0
    %208 = vmatprep.subr.mxu0 0.0
    %209 = vmatpush1.msra.mxu0 0.0
    %210 = vmatprep.subr.mxu0 0.0
    %211 = vmatpush1.msra.mxu0 0.0
    %212 = vmatprep.subr.mxu0 0.0
    %213 = vmatpush1.msra.mxu0 0.0
    %214 = vmatprep.subr.mxu0 0.0
    %215 = vmatpush1.msra.mxu0 0.0
    %216 = vmatprep.subr.mxu0 0.0
    %217 = vmatpush1.msra.mxu0 0.0
    %218 = vmatprep.subr.mxu0 0.0
    %219 = vmatpush1.msra.mxu0 0.0
    %220 = vmatprep.subr.mxu0 0.0
    %221 = vmatpush1.msra.mxu0 0.0
    %222 = vmatprep.mubr.f32.mxu0 0.0
    %223 = vmatmul.mubr.f32.gmra.mrb[0].mxu0 %v153
    %v224 = vpop.f32.mrb[0].mxu0
    %v225 = vadd.f32 %v149, %v224
    %v226 = vpop.f32.mrb[0].mxu0
    %227 = vmatprep.mubr.f32.mxu0 0.0
    %228 = vmatmul.mubr.f32.gmra.mrb[0].mxu0 %v156
    %v229 = vpop.f32.mrb[0].mxu0
    %v230 = vadd.f32 %v149, %v229
    %v231 = vpop.f32.mrb[0].mxu0
    %232 = vdwg.mxu0
    %v233 = vld [vmem:[%s4] sm:$0xff]
    %v234 = vld [vmem:[%s4 + $0x8] sm:$0xff]
    %v235 = vld [vmem:[%s4 + $0x10] sm:$0xff]
    %v236 = vld [vmem:[%s4 + $0x18] sm:$0xff]
    %v238 = vsel %vm151, 0.0, 0
    %240 = vmatprep.subr.mxu0 0.0
    %241 = vmatpush1.msra.mxu0 %v233
    %242 = vmatprep.subr.mxu0 0.0
    %243 = vmatpush1.msra.mxu0 %v234
    %244 = vmatprep.subr.mxu0 0.0
    %245 = vmatpush1.msra.mxu0 %v235
    %246 = vmatprep.subr.mxu0 0.0
    %247 = vmatpush1.msra.mxu0 %v236
    %248 = vmatprep.subr.mxu0 0.0
    %249 = vmatpush1.msra.mxu0 0.0
    %250 = vmatprep.subr.mxu0 0.0
    %251 = vmatpush1.msra.mxu0 0.0
    %252 = vmatprep.subr.mxu0 0.0
    %253 = vmatpush1.msra.mxu0 0.0
    %254 = vmatprep.subr.mxu0 0.0
    %255 = vmatpush1.msra.mxu0 0.0
    %256 = vmatprep.subr.mxu0 0.0
    %257 = vmatpush1.msra.mxu0 0.0
    %258 = vmatprep.subr.mxu0 0.0
    %259 = vmatpush1.msra.mxu0 0.0
    %260 = vmatprep.subr.mxu0 0.0
    %261 = vmatpush1.msra.mxu0 0.0
    %262 = vmatprep.subr.mxu0 0.0
    %263 = vmatpush1.msra.mxu0 0.0
    %264 = vmatprep.subr.mxu0 0.0
    %265 = vmatpush1.msra.mxu0 0.0
    %266 = vmatprep.subr.mxu0 0.0
    %267 = vmatpush1.msra.mxu0 0.0
    %268 = vmatprep.subr.mxu0 0.0
    %269 = vmatpush1.msra.mxu0 0.0
    %270 = vmatprep.subr.mxu0 0.0
    %271 = vmatpush1.msra.mxu0 0.0
    %272 = vmatprep.subr.mxu0 0.0
    %273 = vmatpush1.msra.mxu0 0.0
    %274 = vmatprep.subr.mxu0 0.0
    %275 = vmatpush1.msra.mxu0 0.0
    %276 = vmatprep.subr.mxu0 0.0
    %277 = vmatpush1.msra.mxu0 0.0
    %278 = vmatprep.subr.mxu0 0.0
    %279 = vmatpush1.msra.mxu0 0.0
    %280 = vmatprep.subr.mxu0 0.0
    %281 = vmatpush1.msra.mxu0 0.0
    %282 = vmatprep.subr.mxu0 0.0
    %283 = vmatpush1.msra.mxu0 0.0
    %284 = vmatprep.subr.mxu0 0.0
    %285 = vmatpush1.msra.mxu0 0.0
    %286 = vmatprep.subr.mxu0 0.0
    %287 = vmatpush1.msra.mxu0 0.0
    %288 = vmatprep.subr.mxu0 0.0
    %289 = vmatpush1.msra.mxu0 0.0
    %290 = vmatprep.subr.mxu0 0.0
    %291 = vmatpush1.msra.mxu0 0.0
    %292 = vmatprep.subr.mxu0 0.0
    %293 = vmatpush1.msra.mxu0 0.0
    %294 = vmatprep.subr.mxu0 0.0
    %295 = vmatpush1.msra.mxu0 0.0
    %296 = vmatprep.subr.mxu0 0.0
    %297 = vmatpush1.msra.mxu0 0.0
    %298 = vmatprep.subr.mxu0 0.0
    %299 = vmatpush1.msra.mxu0 0.0
    %300 = vmatprep.subr.mxu0 0.0
    %301 = vmatpush1.msra.mxu0 0.0
    %302 = vmatprep.subr.mxu0 0.0
    %303 = vmatpush1.msra.mxu0 0.0
    %304 = vmatprep.mubr.f32.mxu0 0.0
    %305 = vmatmul.mubr.f32.gmra.mrb[0].mxu0 %v238
    %v306 = vpop.f32.mrb[0].mxu0
    %v307 = vadd.f32 0.0, %v306
    %v308 = vpop.f32.mrb[0].mxu0
    %309 = vdwg.mxu0
    %v310 = vadd.f32 %v225, %v307
    %v311 = vxor.u32 %v310, 2147483648
    %v312 = vmul.f32 %v311, 1.442695
    %v313 = vpow.pop %v312
    %v314 = vadd.f32 %v313, 1.0
    %v315 = vrcp.pop %v314
    %v316 = vmul.f32 1.0, %v315
    %v317 = vtanh.pop %v310
    %v318 = vmul.f32 %v316, 0.0
    %320 = vrot.lane.b32.xlu0 %v317, 64
    %v321 = vpop.permute.xlu0 %320
    %v323 = vmul.f32 %v316, %v321
    %325 = vrot.lane.b32.xlu0 %v323, 32
    %v326 = vpop.permute.xlu0 %325
    %v328 = vadd.f32 %v318, %v326
    %v329 = vtanh.pop %v328
    %331 = vrot.lane.b32.xlu0 %v329, 64
    %v332 = vpop.permute.xlu0 %331
    %v334 = vmul.f32 %v316, %v332
    %336 = vrot.lane.b32.xlu0 %v334, 32
    %v337 = vpop.permute.xlu0 %336
    %v338 = vsel %vm151, %v337, 0
    %340 = vmatprep.subr.mxu0 0.0
    %341 = vmatpush1.msra.mxu0 %v233
    %342 = vmatprep.subr.mxu0 0.0
    %343 = vmatpush1.msra.mxu0 %v234
    %344 = vmatprep.subr.mxu0 0.0
    %345 = vmatpush1.msra.mxu0 %v235
    %346 = vmatprep.subr.mxu0 0.0
    %347 = vmatpush1.msra.mxu0 %v236
    %348 = vmatprep.subr.mxu0 0.0
    %349 = vmatpush1.msra.mxu0 0.0
    %350 = vmatprep.subr.mxu0 0.0
    %351 = vmatpush1.msra.mxu0 0.0
    %352 = vmatprep.subr.mxu0 0.0
    %353 = vmatpush1.msra.mxu0 0.0
    %354 = vmatprep.subr.mxu0 0.0
    %355 = vmatpush1.msra.mxu0 0.0
    %356 = vmatprep.subr.mxu0 0.0
    %357 = vmatpush1.msra.mxu0 0.0
    %358 = vmatprep.subr.mxu0 0.0
    %359 = vmatpush1.msra.mxu0 0.0
    %360 = vmatprep.subr.mxu0 0.0
    %361 = vmatpush1.msra.mxu0 0.0
    %362 = vmatprep.subr.mxu0 0.0
    %363 = vmatpush1.msra.mxu0 0.0
    %364 = vmatprep.subr.mxu0 0.0
    %365 = vmatpush1.msra.mxu0 0.0
    %366 = vmatprep.subr.mxu0 0.0
    %367 = vmatpush1.msra.mxu0 0.0
    %368 = vmatprep.subr.mxu0 0.0
    %369 = vmatpush1.msra.mxu0 0.0
    %370 = vmatprep.subr.mxu0 0.0
    %371 = vmatpush1.msra.mxu0 0.0
    %372 = vmatprep.subr.mxu0 0.0
    %373 = vmatpush1.msra.mxu0 0.0
    %374 = vmatprep.subr.mxu0 0.0
    %375 = vmatpush1.msra.mxu0 0.0
    %376 = vmatprep.subr.mxu0 0.0
    %377 = vmatpush1.msra.mxu0 0.0
    %378 = vmatprep.subr.mxu0 0.0
    %379 = vmatpush1.msra.mxu0 0.0
    %380 = vmatprep.subr.mxu0 0.0
    %381 = vmatpush1.msra.mxu0 0.0
    %382 = vmatprep.subr.mxu0 0.0
    %383 = vmatpush1.msra.mxu0 0.0
    %384 = vmatprep.subr.mxu0 0.0
    %385 = vmatpush1.msra.mxu0 0.0
    %386 = vmatprep.subr.mxu0 0.0
    %387 = vmatpush1.msra.mxu0 0.0
    %388 = vmatprep.subr.mxu0 0.0
    %389 = vmatpush1.msra.mxu0 0.0
    %390 = vmatprep.subr.mxu0 0.0
    %391 = vmatpush1.msra.mxu0 0.0
    %392 = vmatprep.subr.mxu0 0.0
    %393 = vmatpush1.msra.mxu0 0.0
    %394 = vmatprep.subr.mxu0 0.0
    %395 = vmatpush1.msra.mxu0 0.0
    %396 = vmatprep.subr.mxu0 0.0
    %397 = vmatpush1.msra.mxu0 0.0
    %398 = vmatprep.subr.mxu0 0.0
    %399 = vmatpush1.msra.mxu0 0.0
    %400 = vmatprep.subr.mxu0 0.0
    %401 = vmatpush1.msra.mxu0 0.0
    %402 = vmatprep.subr.mxu0 0.0
    %403 = vmatpush1.msra.mxu0 0.0
    %404 = vmatprep.mubr.f32.mxu0 0.0
    %405 = vmatmul.mubr.f32.gmra.mrb[0].mxu0 %v338
    %v406 = vpop.f32.mrb[0].mxu0
    %v407 = vadd.f32 0.0, %v406
    %v408 = vpop.f32.mrb[0].mxu0
    %409 = vdwg.mxu0
    %v411 = vrot.slane %v407, 6
    %v413 = vadd.f32 %v225, %v411
    %v414 = vxor.u32 %v413, 2147483648
    %v415 = vmul.f32 %v414, 1.442695
    %v416 = vpow.pop %v415
    %v417 = vadd.f32 %v416, 1.0
    %v418 = vrcp.pop %v417
    %v419 = vmul.f32 1.0, %v418
    %v420 = vtanh.pop %v413
    %v422 = vrot.slane %v328, 6
    %v424 = vmul.f32 %v419, %v422
    %426 = vrot.lane.b32.xlu0 %v420, 64
    %v427 = vpop.permute.xlu0 %426
    %v429 = vmul.f32 %v419, %v427
    %431 = vrot.lane.b32.xlu0 %v429, 32
    %v432 = vpop.permute.xlu0 %431
    %v434 = vadd.f32 %v424, %v432
    %v435 = vtanh.pop %v434
    %437 = vrot.lane.b32.xlu0 %v435, 64
    %v438 = vpop.permute.xlu0 %437
    %v440 = vmul.f32 %v419, %v438
    %v442 = vrot.slane %v440, 2
    %443 = vrot.lane.b32.xlu0 %v442, 32
    %v444 = vpop.permute.xlu0 %443
    %v445 = vsel %vm151, %v444, 0
    %447 = vmatprep.subr.mxu0 0.0
    %448 = vmatpush1.msra.mxu0 %v233
    %449 = vmatprep.subr.mxu0 0.0
    %450 = vmatpush1.msra.mxu0 %v234
    %451 = vmatprep.subr.mxu0 0.0
    %452 = vmatpush1.msra.mxu0 %v235
    %453 = vmatprep.subr.mxu0 0.0
    %454 = vmatpush1.msra.mxu0 %v236
    %455 = vmatprep.subr.mxu0 0.0
    %456 = vmatpush1.msra.mxu0 0.0
    %457 = vmatprep.subr.mxu0 0.0
    %458 = vmatpush1.msra.mxu0 0.0
    %459 = vmatprep.subr.mxu0 0.0
    %460 = vmatpush1.msra.mxu0 0.0
    %461 = vmatprep.subr.mxu0 0.0
    %462 = vmatpush1.msra.mxu0 0.0
    %463 = vmatprep.subr.mxu0 0.0
    %464 = vmatpush1.msra.mxu0 0.0
    %465 = vmatprep.subr.mxu0 0.0
    %466 = vmatpush1.msra.mxu0 0.0
    %467 = vmatprep.subr.mxu0 0.0
    %468 = vmatpush1.msra.mxu0 0.0
    %469 = vmatprep.subr.mxu0 0.0
    %470 = vmatpush1.msra.mxu0 0.0
    %471 = vmatprep.subr.mxu0 0.0
    %472 = vmatpush1.msra.mxu0 0.0
    %473 = vmatprep.subr.mxu0 0.0
    %474 = vmatpush1.msra.mxu0 0.0
    %475 = vmatprep.subr.mxu0 0.0
    %476 = vmatpush1.msra.mxu0 0.0
    %477 = vmatprep.subr.mxu0 0.0
    %478 = vmatpush1.msra.mxu0 0.0
    %479 = vmatprep.subr.mxu0 0.0
    %480 = vmatpush1.msra.mxu0 0.0
    %481 = vmatprep.subr.mxu0 0.0
    %482 = vmatpush1.msra.mxu0 0.0
    %483 = vmatprep.subr.mxu0 0.0
    %484 = vmatpush1.msra.mxu0 0.0
    %485 = vmatprep.subr.mxu0 0.0
    %486 = vmatpush1.msra.mxu0 0.0
    %487 = vmatprep.subr.mxu0 0.0
    %488 = vmatpush1.msra.mxu0 0.0
    %489 = vmatprep.subr.mxu0 0.0
    %490 = vmatpush1.msra.mxu0 0.0
    %491 = vmatprep.subr.mxu0 0.0
    %492 = vmatpush1.msra.mxu0 0.0
    %493 = vmatprep.subr.mxu0 0.0
    %494 = vmatpush1.msra.mxu0 0.0
    %495 = vmatprep.subr.mxu0 0.0
    %496 = vmatpush1.msra.mxu0 0.0
    %497 = vmatprep.subr.mxu0 0.0
    %498 = vmatpush1.msra.mxu0 0.0
    %499 = vmatprep.subr.mxu0 0.0
    %500 = vmatpush1.msra.mxu0 0.0
    %501 = vmatprep.subr.mxu0 0.0
    %502 = vmatpush1.msra.mxu0 0.0
    %503 = vmatprep.subr.mxu0 0.0
    %504 = vmatpush1.msra.mxu0 0.0
    %505 = vmatprep.subr.mxu0 0.0
    %506 = vmatpush1.msra.mxu0 0.0
    %507 = vmatprep.subr.mxu0 0.0
    %508 = vmatpush1.msra.mxu0 0.0
    %509 = vmatprep.subr.mxu0 0.0
    %510 = vmatpush1.msra.mxu0 0.0
    %511 = vmatprep.mubr.f32.mxu0 0.0
    %512 = vmatmul.mubr.f32.gmra.mrb[0].mxu0 %v445
    %v513 = vpop.f32.mrb[0].mxu0
    %v514 = vadd.f32 0.0, %v513
    %v515 = vpop.f32.mrb[0].mxu0
    %516 = vdwg.mxu0
    %v518 = vrot.slane %v514, 4
    %v520 = vadd.f32 %v225, %v518
    %v521 = vxor.u32 %v520, 2147483648
    %v522 = vmul.f32 %v521, 1.442695
    %v523 = vpow.pop %v522
    %v524 = vadd.f32 %v523, 1.0
    %v525 = vrcp.pop %v524
    %v526 = vmul.f32 1.0, %v525
    %v527 = vtanh.pop %v520
    %v529 = vrot.slane %v434, 6
    %v531 = vmul.f32 %v526, %v529
    %533 = vrot.lane.b32.xlu0 %v527, 64
    %v534 = vpop.permute.xlu0 %533
    %v536 = vmul.f32 %v526, %v534
    %538 = vrot.lane.b32.xlu0 %v536, 32
    %v539 = vpop.permute.xlu0 %538
    %v541 = vadd.f32 %v531, %v539
    %v542 = vtanh.pop %v541
    %544 = vrot.lane.b32.xlu0 %v542, 64
    %v545 = vpop.permute.xlu0 %544
    %v547 = vmul.f32 %v526, %v545
    %v549 = vrot.slane %v547, 4
    %550 = vrot.lane.b32.xlu0 %v549, 32
    %v551 = vpop.permute.xlu0 %550
    %v552 = vsel %vm151, %v551, 0
    %554 = vmatprep.subr.mxu0 0.0
    %555 = vmatpush1.msra.mxu0 %v233
    %556 = vmatprep.subr.mxu0 0.0
    %557 = vmatpush1.msra.mxu0 %v234
    %558 = vmatprep.subr.mxu0 0.0
    %559 = vmatpush1.msra.mxu0 %v235
    %560 = vmatprep.subr.mxu0 0.0
    %561 = vmatpush1.msra.mxu0 %v236
    %562 = vmatprep.subr.mxu0 0.0
    %563 = vmatpush1.msra.mxu0 0.0
    %564 = vmatprep.subr.mxu0 0.0
    %565 = vmatpush1.msra.mxu0 0.0
    %566 = vmatprep.subr.mxu0 0.0
    %567 = vmatpush1.msra.mxu0 0.0
    %568 = vmatprep.subr.mxu0 0.0
    %569 = vmatpush1.msra.mxu0 0.0
    %570 = vmatprep.subr.mxu0 0.0
    %571 = vmatpush1.msra.mxu0 0.0
    %572 = vmatprep.subr.mxu0 0.0
    %573 = vmatpush1.msra.mxu0 0.0
    %574 = vmatprep.subr.mxu0 0.0
    %575 = vmatpush1.msra.mxu0 0.0
    %576 = vmatprep.subr.mxu0 0.0
    %577 = vmatpush1.msra.mxu0 0.0
    %578 = vmatprep.subr.mxu0 0.0
    %579 = vmatpush1.msra.mxu0 0.0
    %580 = vmatprep.subr.mxu0 0.0
    %581 = vmatpush1.msra.mxu0 0.0
    %582 = vmatprep.subr.mxu0 0.0
    %583 = vmatpush1.msra.mxu0 0.0
    %584 = vmatprep.subr.mxu0 0.0
    %585 = vmatpush1.msra.mxu0 0.0
    %586 = vmatprep.subr.mxu0 0.0
    %587 = vmatpush1.msra.mxu0 0.0
    %588 = vmatprep.subr.mxu0 0.0
    %589 = vmatpush1.msra.mxu0 0.0
    %590 = vmatprep.subr.mxu0 0.0
    %591 = vmatpush1.msra.mxu0 0.0
    %592 = vmatprep.subr.mxu0 0.0
    %593 = vmatpush1.msra.mxu0 0.0
    %594 = vmatprep.subr.mxu0 0.0
    %595 = vmatpush1.msra.mxu0 0.0
    %596 = vmatprep.subr.mxu0 0.0
    %597 = vmatpush1.msra.mxu0 0.0
    %598 = vmatprep.subr.mxu0 0.0
    %599 = vmatpush1.msra.mxu0 0.0
    %600 = vmatprep.subr.mxu0 0.0
    %601 = vmatpush1.msra.mxu0 0.0
    %602 = vmatprep.subr.mxu0 0.0
    %603 = vmatpush1.msra.mxu0 0.0
    %604 = vmatprep.subr.mxu0 0.0
    %605 = vmatpush1.msra.mxu0 0.0
    %606 = vmatprep.subr.mxu0 0.0
    %607 = vmatpush1.msra.mxu0 0.0
    %608 = vmatprep.subr.mxu0 0.0
    %609 = vmatpush1.msra.mxu0 0.0
    %610 = vmatprep.subr.mxu0 0.0
    %611 = vmatpush1.msra.mxu0 0.0
    %612 = vmatprep.subr.mxu0 0.0
    %613 = vmatpush1.msra.mxu0 0.0
    %614 = vmatprep.subr.mxu0 0.0
    %615 = vmatpush1.msra.mxu0 0.0
    %616 = vmatprep.subr.mxu0 0.0
    %617 = vmatpush1.msra.mxu0 0.0
    %618 = vmatprep.mubr.f32.mxu0 0.0
    %619 = vmatmul.mubr.f32.gmra.mrb[0].mxu0 %v552
    %v620 = vpop.f32.mrb[0].mxu0
    %v621 = vadd.f32 0.0, %v620
    %v622 = vpop.f32.mrb[0].mxu0
    %623 = vdwg.mxu0
    %v625 = vrot.slane %v621, 2
    %v627 = vadd.f32 %v225, %v625
    %v628 = vxor.u32 %v627, 2147483648
    %v629 = vmul.f32 %v628, 1.442695
    %v630 = vpow.pop %v629
    %v631 = vadd.f32 %v630, 1.0
    %v632 = vrcp.pop %v631
    %v633 = vmul.f32 1.0, %v632
    %v634 = vtanh.pop %v627
    %v636 = vrot.slane %v541, 6
    %v638 = vmul.f32 %v633, %v636
    %640 = vrot.lane.b32.xlu0 %v634, 64
    %v641 = vpop.permute.xlu0 %640
    %v643 = vmul.f32 %v633, %v641
    %645 = vrot.lane.b32.xlu0 %v643, 32
    %v646 = vpop.permute.xlu0 %645
    %v648 = vadd.f32 %v638, %v646
    %v649 = vtanh.pop %v648
    %651 = vrot.lane.b32.xlu0 %v649, 64
    %v652 = vpop.permute.xlu0 %651
    %v654 = vmul.f32 %v633, %v652
    %v656 = vrot.slane %v654, 6
    %657 = vrot.lane.b32.xlu0 %v656, 32
    %v658 = vpop.permute.xlu0 %657
    %v659 = vsel %vm151, %v658, 0
    %661 = vmatprep.subr.mxu0 0.0
    %662 = vmatpush1.msra.mxu0 %v233
    %663 = vmatprep.subr.mxu0 0.0
    %664 = vmatpush1.msra.mxu0 %v234
    %665 = vmatprep.subr.mxu0 0.0
    %666 = vmatpush1.msra.mxu0 %v235
    %667 = vmatprep.subr.mxu0 0.0
    %668 = vmatpush1.msra.mxu0 %v236
    %669 = vmatprep.subr.mxu0 0.0
    %670 = vmatpush1.msra.mxu0 0.0
    %671 = vmatprep.subr.mxu0 0.0
    %672 = vmatpush1.msra.mxu0 0.0
    %673 = vmatprep.subr.mxu0 0.0
    %674 = vmatpush1.msra.mxu0 0.0
    %675 = vmatprep.subr.mxu0 0.0
    %676 = vmatpush1.msra.mxu0 0.0
    %677 = vmatprep.subr.mxu0 0.0
    %678 = vmatpush1.msra.mxu0 0.0
    %679 = vmatprep.subr.mxu0 0.0
    %680 = vmatpush1.msra.mxu0 0.0
    %681 = vmatprep.subr.mxu0 0.0
    %682 = vmatpush1.msra.mxu0 0.0
    %683 = vmatprep.subr.mxu0 0.0
    %684 = vmatpush1.msra.mxu0 0.0
    %685 = vmatprep.subr.mxu0 0.0
    %686 = vmatpush1.msra.mxu0 0.0
    %687 = vmatprep.subr.mxu0 0.0
    %688 = vmatpush1.msra.mxu0 0.0
    %689 = vmatprep.subr.mxu0 0.0
    %690 = vmatpush1.msra.mxu0 0.0
    %691 = vmatprep.subr.mxu0 0.0
    %692 = vmatpush1.msra.mxu0 0.0
    %693 = vmatprep.subr.mxu0 0.0
    %694 = vmatpush1.msra.mxu0 0.0
    %695 = vmatprep.subr.mxu0 0.0
    %696 = vmatpush1.msra.mxu0 0.0
    %697 = vmatprep.subr.mxu0 0.0
    %698 = vmatpush1.msra.mxu0 0.0
    %699 = vmatprep.subr.mxu0 0.0
    %700 = vmatpush1.msra.mxu0 0.0
    %701 = vmatprep.subr.mxu0 0.0
    %702 = vmatpush1.msra.mxu0 0.0
    %703 = vmatprep.subr.mxu0 0.0
    %704 = vmatpush1.msra.mxu0 0.0
    %705 = vmatprep.subr.mxu0 0.0
    %706 = vmatpush1.msra.mxu0 0.0
    %707 = vmatprep.subr.mxu0 0.0
    %708 = vmatpush1.msra.mxu0 0.0
    %709 = vmatprep.subr.mxu0 0.0
    %710 = vmatpush1.msra.mxu0 0.0
    %711 = vmatprep.subr.mxu0 0.0
    %712 = vmatpush1.msra.mxu0 0.0
    %713 = vmatprep.subr.mxu0 0.0
    %714 = vmatpush1.msra.mxu0 0.0
    %715 = vmatprep.subr.mxu0 0.0
    %716 = vmatpush1.msra.mxu0 0.0
    %717 = vmatprep.subr.mxu0 0.0
    %718 = vmatpush1.msra.mxu0 0.0
    %719 = vmatprep.subr.mxu0 0.0
    %720 = vmatpush1.msra.mxu0 0.0
    %721 = vmatprep.subr.mxu0 0.0
    %722 = vmatpush1.msra.mxu0 0.0
    %723 = vmatprep.subr.mxu0 0.0
    %724 = vmatpush1.msra.mxu0 0.0
    %725 = vmatprep.mubr.f32.mxu0 0.0
    %726 = vmatmul.mubr.f32.gmra.mrb[0].mxu0 %v659
    %v727 = vpop.f32.mrb[0].mxu0
    %v728 = vadd.f32 0.0, %v727
    %v729 = vpop.f32.mrb[0].mxu0
    %730 = vdwg.mxu0
    %v731 = vadd.f32 %v230, %v728
    %v732 = vxor.u32 %v731, 2147483648
    %v733 = vmul.f32 %v732, 1.442695
    %v734 = vpow.pop %v733
    %v735 = vadd.f32 %v734, 1.0
    %v736 = vrcp.pop %v735
    %v737 = vmul.f32 1.0, %v736
    %v738 = vtanh.pop %v731
    %v740 = vrot.slane %v648, 6
    %v742 = vmul.f32 %v737, %v740
    %744 = vrot.lane.b32.xlu0 %v738, 64
    %v745 = vpop.permute.xlu0 %744
    %v747 = vmul.f32 %v737, %v745
    %749 = vrot.lane.b32.xlu0 %v747, 32
    %v750 = vpop.permute.xlu0 %749
    %v752 = vadd.f32 %v742, %v750
    %v753 = vtanh.pop %v752
    %755 = vrot.lane.b32.xlu0 %v753, 64
    %v756 = vpop.permute.xlu0 %755
    %v758 = vmul.f32 %v737, %v756
    %760 = vrot.lane.b32.xlu0 %v758, 32
    %v761 = vpop.permute.xlu0 %760
    %v762 = vsel %vm151, %v761, 0
    %764 = vmatprep.subr.mxu0 0.0
    %765 = vmatpush1.msra.mxu0 %v233
    %766 = vmatprep.subr.mxu0 0.0
    %767 = vmatpush1.msra.mxu0 %v234
    %768 = vmatprep.subr.mxu0 0.0
    %769 = vmatpush1.msra.mxu0 %v235
    %770 = vmatprep.subr.mxu0 0.0
    %771 = vmatpush1.msra.mxu0 %v236
    %772 = vmatprep.subr.mxu0 0.0
    %773 = vmatpush1.msra.mxu0 0.0
    %774 = vmatprep.subr.mxu0 0.0
    %775 = vmatpush1.msra.mxu0 0.0
    %776 = vmatprep.subr.mxu0 0.0
    %777 = vmatpush1.msra.mxu0 0.0
    %778 = vmatprep.subr.mxu0 0.0
    %779 = vmatpush1.msra.mxu0 0.0
    %780 = vmatprep.subr.mxu0 0.0
    %781 = vmatpush1.msra.mxu0 0.0
    %782 = vmatprep.subr.mxu0 0.0
    %783 = vmatpush1.msra.mxu0 0.0
    %784 = vmatprep.subr.mxu0 0.0
    %785 = vmatpush1.msra.mxu0 0.0
    %786 = vmatprep.subr.mxu0 0.0
    %787 = vmatpush1.msra.mxu0 0.0
    %788 = vmatprep.subr.mxu0 0.0
    %789 = vmatpush1.msra.mxu0 0.0
    %790 = vmatprep.subr.mxu0 0.0
    %791 = vmatpush1.msra.mxu0 0.0
    %792 = vmatprep.subr.mxu0 0.0
    %793 = vmatpush1.msra.mxu0 0.0
    %794 = vmatprep.subr.mxu0 0.0
    %795 = vmatpush1.msra.mxu0 0.0
    %796 = vmatprep.subr.mxu0 0.0
    %797 = vmatpush1.msra.mxu0 0.0
    %798 = vmatprep.subr.mxu0 0.0
    %799 = vmatpush1.msra.mxu0 0.0
    %800 = vmatprep.subr.mxu0 0.0
    %801 = vmatpush1.msra.mxu0 0.0
    %802 = vmatprep.subr.mxu0 0.0
    %803 = vmatpush1.msra.mxu0 0.0
    %804 = vmatprep.subr.mxu0 0.0
    %805 = vmatpush1.msra.mxu0 0.0
    %806 = vmatprep.subr.mxu0 0.0
    %807 = vmatpush1.msra.mxu0 0.0
    %808 = vmatprep.subr.mxu0 0.0
    %809 = vmatpush1.msra.mxu0 0.0
    %810 = vmatprep.subr.mxu0 0.0
    %811 = vmatpush1.msra.mxu0 0.0
    %812 = vmatprep.subr.mxu0 0.0
    %813 = vmatpush1.msra.mxu0 0.0
    %814 = vmatprep.subr.mxu0 0.0
    %815 = vmatpush1.msra.mxu0 0.0
    %816 = vmatprep.subr.mxu0 0.0
    %817 = vmatpush1.msra.mxu0 0.0
    %818 = vmatprep.subr.mxu0 0.0
    %819 = vmatpush1.msra.mxu0 0.0
    %820 = vmatprep.subr.mxu0 0.0
    %821 = vmatpush1.msra.mxu0 0.0
    %822 = vmatprep.subr.mxu0 0.0
    %823 = vmatpush1.msra.mxu0 0.0
    %824 = vmatprep.subr.mxu0 0.0
    %825 = vmatpush1.msra.mxu0 0.0
    %826 = vmatprep.subr.mxu0 0.0
    %827 = vmatpush1.msra.mxu0 0.0
    %828 = vmatprep.mubr.f32.mxu0 0.0
    %829 = vmatmul.mubr.f32.gmra.mrb[0].mxu0 %v762
    %v830 = vpop.f32.mrb[0].mxu0
    %v831 = vadd.f32 0.0, %v830
    %v832 = vpop.f32.mrb[0].mxu0
    %833 = vdwg.mxu0
    %v835 = vrot.slane %v831, 6
    %v837 = vadd.f32 %v230, %v835
    %v838 = vxor.u32 %v837, 2147483648
    %v839 = vmul.f32 %v838, 1.442695
    %v840 = vpow.pop %v839
    %v841 = vadd.f32 %v840, 1.0
    %v842 = vrcp.pop %v841
    %v843 = vmul.f32 1.0, %v842
    %v844 = vtanh.pop %v837
    %v846 = vrot.slane %v752, 6
    %v848 = vmul.f32 %v843, %v846
    %850 = vrot.lane.b32.xlu0 %v844, 64
    %v851 = vpop.permute.xlu0 %850
    %v853 = vmul.f32 %v843, %v851
    %855 = vrot.lane.b32.xlu0 %v853, 32
    %v856 = vpop.permute.xlu0 %855
    %v858 = vadd.f32 %v848, %v856
    %v859 = vtanh.pop %v858
    %861 = vrot.lane.b32.xlu0 %v859, 64
    %v862 = vpop.permute.xlu0 %861
    %v864 = vmul.f32 %v843, %v862
    %v866 = vrot.slane %v864, 2
    %867 = vrot.lane.b32.xlu0 %v866, 32
    %v868 = vpop.permute.xlu0 %867
    %v869 = vsel %vm151, %v868, 0
    %871 = vmatprep.subr.mxu0 0.0
    %872 = vmatpush1.msra.mxu0 %v233
    %873 = vmatprep.subr.mxu0 0.0
    %874 = vmatpush1.msra.mxu0 %v234
    %875 = vmatprep.subr.mxu0 0.0
    %876 = vmatpush1.msra.mxu0 %v235
    %877 = vmatprep.subr.mxu0 0.0
    %878 = vmatpush1.msra.mxu0 %v236
    %879 = vmatprep.subr.mxu0 0.0
    %880 = vmatpush1.msra.mxu0 0.0
    %881 = vmatprep.subr.mxu0 0.0
    %882 = vmatpush1.msra.mxu0 0.0
    %883 = vmatprep.subr.mxu0 0.0
    %884 = vmatpush1.msra.mxu0 0.0
    %885 = vmatprep.subr.mxu0 0.0
    %886 = vmatpush1.msra.mxu0 0.0
    %887 = vmatprep.subr.mxu0 0.0
    %888 = vmatpush1.msra.mxu0 0.0
    %889 = vmatprep.subr.mxu0 0.0
    %890 = vmatpush1.msra.mxu0 0.0
    %891 = vmatprep.subr.mxu0 0.0
    %892 = vmatpush1.msra.mxu0 0.0
    %893 = vmatprep.subr.mxu0 0.0
    %894 = vmatpush1.msra.mxu0 0.0
    %895 = vmatprep.subr.mxu0 0.0
    %896 = vmatpush1.msra.mxu0 0.0
    %897 = vmatprep.subr.mxu0 0.0
    %898 = vmatpush1.msra.mxu0 0.0
    %899 = vmatprep.subr.mxu0 0.0
    %900 = vmatpush1.msra.mxu0 0.0
    %901 = vmatprep.subr.mxu0 0.0
    %902 = vmatpush1.msra.mxu0 0.0
    %903 = vmatprep.subr.mxu0 0.0
    %904 = vmatpush1.msra.mxu0 0.0
    %905 = vmatprep.subr.mxu0 0.0
    %906 = vmatpush1.msra.mxu0 0.0
    %907 = vmatprep.subr.mxu0 0.0
    %908 = vmatpush1.msra.mxu0 0.0
    %909 = vmatprep.subr.mxu0 0.0
    %910 = vmatpush1.msra.mxu0 0.0
    %911 = vmatprep.subr.mxu0 0.0
    %912 = vmatpush1.msra.mxu0 0.0
    %913 = vmatprep.subr.mxu0 0.0
    %914 = vmatpush1.msra.mxu0 0.0
    %915 = vmatprep.subr.mxu0 0.0
    %916 = vmatpush1.msra.mxu0 0.0
    %917 = vmatprep.subr.mxu0 0.0
    %918 = vmatpush1.msra.mxu0 0.0
    %919 = vmatprep.subr.mxu0 0.0
    %920 = vmatpush1.msra.mxu0 0.0
    %921 = vmatprep.subr.mxu0 0.0
    %922 = vmatpush1.msra.mxu0 0.0
    %923 = vmatprep.subr.mxu0 0.0
    %924 = vmatpush1.msra.mxu0 0.0
    %925 = vmatprep.subr.mxu0 0.0
    %926 = vmatpush1.msra.mxu0 0.0
    %927 = vmatprep.subr.mxu0 0.0
    %928 = vmatpush1.msra.mxu0 0.0
    %929 = vmatprep.subr.mxu0 0.0
    %930 = vmatpush1.msra.mxu0 0.0
    %931 = vmatprep.subr.mxu0 0.0
    %932 = vmatpush1.msra.mxu0 0.0
    %933 = vmatprep.subr.mxu0 0.0
    %934 = vmatpush1.msra.mxu0 0.0
    %935 = vmatprep.mubr.f32.mxu0 0.0
    %936 = vmatmul.mubr.f32.gmra.mrb[0].mxu0 %v869
    %v937 = vpop.f32.mrb[0].mxu0
    %v938 = vadd.f32 0.0, %v937
    %v939 = vpop.f32.mrb[0].mxu0
    %940 = vdwg.mxu0
    %v942 = vrot.slane %v938, 4
    %v944 = vadd.f32 %v230, %v942
    %v945 = vxor.u32 %v944, 2147483648
    %v946 = vmul.f32 %v945, 1.442695
    %v947 = vpow.pop %v946
    %v948 = vadd.f32 %v947, 1.0
    %v949 = vrcp.pop %v948
    %v950 = vmul.f32 1.0, %v949
    %v951 = vtanh.pop %v944
    %v953 = vrot.slane %v858, 6
    %v955 = vmul.f32 %v950, %v953
    %957 = vrot.lane.b32.xlu0 %v951, 64
    %v958 = vpop.permute.xlu0 %957
    %v960 = vmul.f32 %v950, %v958
    %962 = vrot.lane.b32.xlu0 %v960, 32
    %v963 = vpop.permute.xlu0 %962
    %v965 = vadd.f32 %v955, %v963
    %v966 = vtanh.pop %v965
    %968 = vrot.lane.b32.xlu0 %v966, 64
    %v969 = vpop.permute.xlu0 %968
    %v971 = vmul.f32 %v950, %v969
    %v973 = vrot.slane %v971, 4
    %974 = vrot.lane.b32.xlu0 %v973, 32
    %v975 = vpop.permute.xlu0 %974
    %v976 = vsel %vm151, %v975, 0
    %978 = vmatprep.subr.mxu0 0.0
    %979 = vmatpush1.msra.mxu0 %v233
    %980 = vmatprep.subr.mxu0 0.0
    %981 = vmatpush1.msra.mxu0 %v234
    %982 = vmatprep.subr.mxu0 0.0
    %983 = vmatpush1.msra.mxu0 %v235
    %984 = vmatprep.subr.mxu0 0.0
    %985 = vmatpush1.msra.mxu0 %v236
    %986 = vmatprep.subr.mxu0 0.0
    %987 = vmatpush1.msra.mxu0 0.0
    %988 = vmatprep.subr.mxu0 0.0
    %989 = vmatpush1.msra.mxu0 0.0
    %990 = vmatprep.subr.mxu0 0.0
    %991 = vmatpush1.msra.mxu0 0.0
    %992 = vmatprep.subr.mxu0 0.0
    %993 = vmatpush1.msra.mxu0 0.0
    %994 = vmatprep.subr.mxu0 0.0
    %995 = vmatpush1.msra.mxu0 0.0
    %996 = vmatprep.subr.mxu0 0.0
    %997 = vmatpush1.msra.mxu0 0.0
    %998 = vmatprep.subr.mxu0 0.0
    %999 = vmatpush1.msra.mxu0 0.0
    %1000 = vmatprep.subr.mxu0 0.0
    %1001 = vmatpush1.msra.mxu0 0.0
    %1002 = vmatprep.subr.mxu0 0.0
    %1003 = vmatpush1.msra.mxu0 0.0
    %1004 = vmatprep.subr.mxu0 0.0
    %1005 = vmatpush1.msra.mxu0 0.0
    %1006 = vmatprep.subr.mxu0 0.0
    %1007 = vmatpush1.msra.mxu0 0.0
    %1008 = vmatprep.subr.mxu0 0.0
    %1009 = vmatpush1.msra.mxu0 0.0
    %1010 = vmatprep.subr.mxu0 0.0
    %1011 = vmatpush1.msra.mxu0 0.0
    %1012 = vmatprep.subr.mxu0 0.0
    %1013 = vmatpush1.msra.mxu0 0.0
    %1014 = vmatprep.subr.mxu0 0.0
    %1015 = vmatpush1.msra.mxu0 0.0
    %1016 = vmatprep.subr.mxu0 0.0
    %1017 = vmatpush1.msra.mxu0 0.0
    %1018 = vmatprep.subr.mxu0 0.0
    %1019 = vmatpush1.msra.mxu0 0.0
    %1020 = vmatprep.subr.mxu0 0.0
    %1021 = vmatpush1.msra.mxu0 0.0
    %1022 = vmatprep.subr.mxu0 0.0
    %1023 = vmatpush1.msra.mxu0 0.0
    %1024 = vmatprep.subr.mxu0 0.0
    %1025 = vmatpush1.msra.mxu0 0.0
    %1026 = vmatprep.subr.mxu0 0.0
    %1027 = vmatpush1.msra.mxu0 0.0
    %1028 = vmatprep.subr.mxu0 0.0
    %1029 = vmatpush1.msra.mxu0 0.0
    %1030 = vmatprep.subr.mxu0 0.0
    %1031 = vmatpush1.msra.mxu0 0.0
    %1032 = vmatprep.subr.mxu0 0.0
    %1033 = vmatpush1.msra.mxu0 0.0
    %1034 = vmatprep.subr.mxu0 0.0
    %1035 = vmatpush1.msra.mxu0 0.0
    %1036 = vmatprep.subr.mxu0 0.0
    %1037 = vmatpush1.msra.mxu0 0.0
    %1038 = vmatprep.subr.mxu0 0.0
    %1039 = vmatpush1.msra.mxu0 0.0
    %1040 = vmatprep.subr.mxu0 0.0
    %1041 = vmatpush1.msra.mxu0 0.0
    %1042 = vmatprep.mubr.f32.mxu0 0.0
    %1043 = vmatmul.mubr.f32.gmra.mrb[0].mxu0 %v976
    %v1044 = vpop.f32.mrb[0].mxu0
    %v1045 = vadd.f32 0.0, %v1044
    %v1046 = vpop.f32.mrb[0].mxu0
    %1047 = vdwg.mxu0
    %v1049 = vrot.slane %v1045, 2
    %v1051 = vadd.f32 %v230, %v1049
    %v1052 = vxor.u32 %v1051, 2147483648
    %v1053 = vmul.f32 %v1052, 1.442695
    %v1054 = vpow.pop %v1053
    %v1055 = vadd.f32 %v1054, 1.0
    %v1056 = vrcp.pop %v1055
    %v1057 = vmul.f32 1.0, %v1056
    %v1058 = vtanh.pop %v1051
    %v1060 = vrot.slane %v965, 6
    %v1062 = vmul.f32 %v1057, %v1060
    %1064 = vrot.lane.b32.xlu0 %v1058, 64
    %v1065 = vpop.permute.xlu0 %1064
    %v1067 = vmul.f32 %v1057, %v1065
    %1069 = vrot.lane.b32.xlu0 %v1067, 32
    %v1070 = vpop.permute.xlu0 %1069
    %v1072 = vadd.f32 %v1062, %v1070
    %v1073 = vtanh.pop %v1072
    %1075 = vrot.lane.b32.xlu0 %v1073, 64
    %v1076 = vpop.permute.xlu0 %1075
    %v1078 = vmul.f32 %v1057, %v1076
    %v1079 = vld [vmem:[%s6] sm:$0xff]
    %v1080 = vld [vmem:[%s6 + $0x8] sm:$0xff]
    %v1081 = vld [vmem:[%s6 + $0x10] sm:$0xff]
    %v1082 = vld [vmem:[%s6 + $0x18] sm:$0xff]
    %v1083 = vld [vmem:[%s7] sm:$0x1]
    %v1085 = vlaneseq
    %v1086 = vshrl.u32 %v1085, 7
    %v1087 = vsub.s32 0, %v1086
    %v1088 = vrot.slane %v1083, %v1087
    %v1091 = vrot.slane %v1078, 6
    %1092 = vrot.lane.b32.xlu0 %v1091, 32
    %v1093 = vpop.permute.xlu0 %1092
    %v1094 = vsel %vm151, %v1093, 0
    %1096 = vmatprep.subr.mxu0 0.0
    %1097 = vmatpush1.msra.mxu0 %v1079
    %1098 = vmatprep.subr.mxu0 0.0
    %1099 = vmatpush1.msra.mxu0 %v1080
    %1100 = vmatprep.subr.mxu0 0.0
    %1101 = vmatpush1.msra.mxu0 %v1081
    %1102 = vmatprep.subr.mxu0 0.0
    %1103 = vmatpush1.msra.mxu0 %v1082
    %1104 = vmatprep.subr.mxu0 0.0
    %1105 = vmatpush1.msra.mxu0 0.0
    %1106 = vmatprep.subr.mxu0 0.0
    %1107 = vmatpush1.msra.mxu0 0.0
    %1108 = vmatprep.subr.mxu0 0.0
    %1109 = vmatpush1.msra.mxu0 0.0
    %1110 = vmatprep.subr.mxu0 0.0
    %1111 = vmatpush1.msra.mxu0 0.0
    %1112 = vmatprep.subr.mxu0 0.0
    %1113 = vmatpush1.msra.mxu0 0.0
    %1114 = vmatprep.subr.mxu0 0.0
    %1115 = vmatpush1.msra.mxu0 0.0
    %1116 = vmatprep.subr.mxu0 0.0
    %1117 = vmatpush1.msra.mxu0 0.0
    %1118 = vmatprep.subr.mxu0 0.0
    %1119 = vmatpush1.msra.mxu0 0.0
    %1120 = vmatprep.subr.mxu0 0.0
    %1121 = vmatpush1.msra.mxu0 0.0
    %1122 = vmatprep.subr.mxu0 0.0
    %1123 = vmatpush1.msra.mxu0 0.0
    %1124 = vmatprep.subr.mxu0 0.0
    %1125 = vmatpush1.msra.mxu0 0.0
    %1126 = vmatprep.subr.mxu0 0.0
    %1127 = vmatpush1.msra.mxu0 0.0
    %1128 = vmatprep.subr.mxu0 0.0
    %1129 = vmatpush1.msra.mxu0 0.0
    %1130 = vmatprep.subr.mxu0 0.0
    %1131 = vmatpush1.msra.mxu0 0.0
    %1132 = vmatprep.subr.mxu0 0.0
    %1133 = vmatpush1.msra.mxu0 0.0
    %1134 = vmatprep.subr.mxu0 0.0
    %1135 = vmatpush1.msra.mxu0 0.0
    %1136 = vmatprep.subr.mxu0 0.0
    %1137 = vmatpush1.msra.mxu0 0.0
    %1138 = vmatprep.subr.mxu0 0.0
    %1139 = vmatpush1.msra.mxu0 0.0
    %1140 = vmatprep.subr.mxu0 0.0
    %1141 = vmatpush1.msra.mxu0 0.0
    %1142 = vmatprep.subr.mxu0 0.0
    %1143 = vmatpush1.msra.mxu0 0.0
    %1144 = vmatprep.subr.mxu0 0.0
    %1145 = vmatpush1.msra.mxu0 0.0
    %1146 = vmatprep.subr.mxu0 0.0
    %1147 = vmatpush1.msra.mxu0 0.0
    %1148 = vmatprep.subr.mxu0 0.0
    %1149 = vmatpush1.msra.mxu0 0.0
    %1150 = vmatprep.subr.mxu0 0.0
    %1151 = vmatpush1.msra.mxu0 0.0
    %1152 = vmatprep.subr.mxu0 0.0
    %1153 = vmatpush1.msra.mxu0 0.0
    %1154 = vmatprep.subr.mxu0 0.0
    %1155 = vmatpush1.msra.mxu0 0.0
    %1156 = vmatprep.subr.mxu0 0.0
    %1157 = vmatpush1.msra.mxu0 0.0
    %1158 = vmatprep.subr.mxu0 0.0
    %1159 = vmatpush1.msra.mxu0 0.0
    %1160 = vmatprep.mubr.f32.mxu0 0.0
    %1161 = vmatmul.mubr.f32.gmra.mrb[0].mxu0 %v1094
    %v1162 = vpop.f32.mrb[0].mxu0
    %v1163 = vadd.f32 %v1088, %v1162
    %v1164 = vpop.f32.mrb[0].mxu0
    %1165 = vdwg.mxu0
    %vm1166 = vcmask 9216
    %1167 = vst.msk [vmem:[#allocation5] sm:$0x3] %vm1166, %v1163
    // Predicated region
    $region38: #{tpu_custom_call.1} parent=1 // pred_check
      _
    $region39: #{tpu_custom_call.1} parent=1 // pred_check_branch
      %1169 = sbr.rel (0) target = $region41
    $region40: #{tpu_custom_call.1} parent=1 // pred_region
      %s1171 = ssub.s32 32, 32
      %1172 = vsyncadd [#allocation4], %s1171
      %s1174 = sshll.u32 [#allocation5], 4
      %s1175 = int_to_ptr.vmem [resolvable:$true] %s1174
      %1177 = dma.vmem_to_hbm [thread:$0]  %s1175, 32, %s8, [#allocation4]
    $region41: #{tpu_custom_call.1} parent=1 // pred_fallthru
      _
    // Predicated region
    $region42: #{tpu_custom_call.1} parent=1 // pred_check
      _
    $region43: #{tpu_custom_call.1} parent=1 // pred_check_branch
      %1179 = sbr.rel (0) target = $region45
    $region44: #{tpu_custom_call.1} parent=1 // pred_region
      %1180 = dma.done [#allocation4], 32
    $region45: #{tpu_custom_call.1} parent=1 // pred_fallthru
      _
    %1181 = vsyncpa [#allocation3], 1
    %1182 = vsyncpa [#allocation4], 1

</llo_original>
